<compile_context>
chip_gen: v7x
topology: tpu7x:2x2x1
jax: 0.10.0
libtpu: 0.0.40
codegen_flags: <defaults>
</compile_context>

<pallas_src>
import jax
import jax.numpy as jnp
from jax.experimental import pallas as pl
from jax.experimental.pallas import tpu as pltpu

# Layer sizes (from the PyTorch module).
IN1, H1, H2, OUT = 8, 6, 4, 1

# Flat offsets inside the packed parameter array (torch layout W:(out,in)).
W1_OFF = 0
B1_OFF = W1_OFF + H1 * IN1          # 48
W2_OFF = B1_OFF + H1                # 54
B2_OFF = W2_OFF + H2 * H1           # 78
W3_OFF = B2_OFF + H2                # 82
B3_OFF = W3_OFF + OUT * H2          # 86
PACKED_SIZE = 128                   # 87 used, padded to 128 f32 (512 B SMEM)


def mlp_kernel(p_ref, x_ref, o_ref):
    """p_ref: (PACKED_SIZE,) f32 in SMEM (all weights/biases, packed).
    x_ref : (B, IN1) f32 in VMEM (natural layout, no wrapper transpose).
    o_ref : (B, OUT) f32 in VMEM (stored directly, no wrapper transpose)."""

    # Single load of the whole activation tile; feature columns are cheap
    # in-register slices (one vld instead of IN1 vld issues).
    x = x_ref[...]                                    # (B, IN1)
    cols = [x[:, k:k + 1] for k in range(IN1)]        # each (B, 1)

    def dense(cols_in, in_dim, out_dim, w_off, b_off, relu):
        """Unrolled VPU MAC layer: out_j = act(b_j + sum_k W[j,k] * cols[k])."""
        outs = []
        for j in range(out_dim):
            acc = jnp.full_like(cols_in[0], p_ref[b_off + j])
            for k in range(in_dim):
                acc = acc + p_ref[w_off + j * in_dim + k] * cols_in[k]
            outs.append(jnp.maximum(acc, 0.0) if relu else acc)
        return outs

    h1 = dense(cols, IN1, H1, W1_OFF, B1_OFF, relu=True)
    h2 = dense(h1, H1, H2, W2_OFF, B2_OFF, relu=True)
    z = dense(h2, H2, OUT, W3_OFF, B3_OFF, relu=False)[0]   # (B, 1)

    # sigmoid(z) = 1 / (1 + exp(-z)); exp and approx reciprocal both run on
    # the EUP, keeping the epilogue off the VALU.
    o_ref[...] = pl.reciprocal(1.0 + jnp.exp(-z), approx=True).astype(o_ref.dtype)


@jax.jit
def mlp_forward(x, packed_params):
    """x: (batch, 8) f32.  packed_params: (PACKED_SIZE,) f32.  Returns (batch, 1)."""
    batch = x.shape[0]
    return pl.pallas_call(
        mlp_kernel,
        out_shape=jax.ShapeDtypeStruct((batch, OUT), jnp.float32),
        in_specs=[
            pl.BlockSpec(memory_space=pltpu.MemorySpace.SMEM),  # packed params
            pl.BlockSpec(memory_space=pltpu.MemorySpace.VMEM),  # x, natural layout
        ],
        out_specs=pl.BlockSpec(memory_space=pltpu.MemorySpace.VMEM),
        cost_estimate=pl.CostEstimate(
            flops=2 * (IN1 * H1 + H1 * H2 + H2 * OUT) * batch,   # 152 flop/sample
            transcendentals=batch,                               # one exp/sample
            bytes_accessed=4 * (IN1 + OUT) * batch + 4 * PACKED_SIZE,
        ),
    )(packed_params, x)


def init_params(key):
    """torch.nn.Linear-style init: W:(out,in), b:(out,), U(-1/sqrt(fan_in), +)."""
    dims = [(IN1, H1), (H1, H2), (H2, OUT)]
    params = []
    for fan_in, fan_out in dims:
        kw, kb, key = jax.random.split(key, 3)
        bound = 1.0 / jnp.sqrt(float(fan_in))
        w = jax.random.uniform(kw, (fan_out, fan_in), jnp.float32, -bound, bound)
        b = jax.random.uniform(kb, (fan_out,), jnp.float32, -bound, bound)
        params.extend([w, b])
    return tuple(params)


def pack_params(params):
    """Flatten all weights/biases into one padded f32 array (single transfer)."""
    w1, b1, w2, b2, w3, b3 = params
    flat = jnp.concatenate(
        [w1.ravel(), b1.ravel(), w2.ravel(), b2.ravel(), w3.ravel(), b3.ravel()]
    )
    return jnp.pad(flat, (0, PACKED_SIZE - flat.shape[0]))


if __name__ == "__main__":
    key = jax.random.PRNGKey(0)
    kx, kp = jax.random.split(key)

    batch = 8
    x = jax.random.normal(kx, (batch, IN1), dtype=jnp.float32)
    params = init_params(kp)
    packed = pack_params(params)

    out = mlp_forward(x, packed)
    jax.block_until_ready(out)

    # Reference in plain JAX (HIGHEST precision).  The kernel's compute path is
    # exact f32 VPU; the only approximation is the EUP reciprocal in the
    # sigmoid epilogue (~2^-13 relative error on a value <= 1), hence atol=1e-3.
    w1, b1, w2, b2, w3, b3 = params
    hp = jax.lax.Precision.HIGHEST
    h = jnp.maximum(jnp.dot(x, w1.T, precision=hp) + b1, 0.0)
    h = jnp.maximum(jnp.dot(h, w2.T, precision=hp) + b2, 0.0)
    ref = jax.nn.sigmoid(jnp.dot(h, w3.T, precision=hp) + b3)

    assert out.shape == (batch, 1)
    assert jnp.allclose(out, ref, atol=1e-3), "mismatch vs reference"

    print("KERNEL_OK")
</pallas_src>

<mosaic_0001>
module attributes {stable_mosaic.version = 11 : i64} {
  func.func @mlp_kernel(%arg0: memref<128xf32, #tpu.memory_space<smem>>, %arg1: memref<8x8xf32, #tpu.memory_space<vmem>>, %arg2: memref<8x1xf32, #tpu.memory_space<vmem>>) attributes {dimension_semantics = [], scalar_prefetch = 0 : i64, scratch_operands = 0 : i64, tpu.core_type = #tpu.core_type<tc>} {
    %c0 = arith.constant 0 : index
    %c0_0 = arith.constant 0 : index
    %0 = vector.load %arg1[%c0, %c0_0] : memref<8x8xf32, #tpu.memory_space<vmem>>, vector<8x8xf32>
    %1 = vector.extract_strided_slice %0 {offsets = [0, 0], sizes = [8, 1], strides = [1, 1]} : vector<8x8xf32> to vector<8x1xf32>
    %2 = vector.extract_strided_slice %0 {offsets = [0, 1], sizes = [8, 1], strides = [1, 1]} : vector<8x8xf32> to vector<8x1xf32>
    %3 = vector.extract_strided_slice %0 {offsets = [0, 2], sizes = [8, 1], strides = [1, 1]} : vector<8x8xf32> to vector<8x1xf32>
    %4 = vector.extract_strided_slice %0 {offsets = [0, 3], sizes = [8, 1], strides = [1, 1]} : vector<8x8xf32> to vector<8x1xf32>
    %5 = vector.extract_strided_slice %0 {offsets = [0, 4], sizes = [8, 1], strides = [1, 1]} : vector<8x8xf32> to vector<8x1xf32>
    %6 = vector.extract_strided_slice %0 {offsets = [0, 5], sizes = [8, 1], strides = [1, 1]} : vector<8x8xf32> to vector<8x1xf32>
    %7 = vector.extract_strided_slice %0 {offsets = [0, 6], sizes = [8, 1], strides = [1, 1]} : vector<8x8xf32> to vector<8x1xf32>
    %8 = vector.extract_strided_slice %0 {offsets = [0, 7], sizes = [8, 1], strides = [1, 1]} : vector<8x8xf32> to vector<8x1xf32>
    %c48 = arith.constant 48 : index
    %9 = memref.load %arg0[%c48] : memref<128xf32, #tpu.memory_space<smem>>
    %10 = vector.broadcast %9 : f32 to vector<8x1xf32>
    %c0_1 = arith.constant 0 : index
    %11 = memref.load %arg0[%c0_1] : memref<128xf32, #tpu.memory_space<smem>>
    %12 = vector.broadcast %11 : f32 to vector<8x1xf32>
    %13 = arith.mulf %12, %1 : vector<8x1xf32>
    %14 = arith.addf %10, %13 : vector<8x1xf32>
    %c1 = arith.constant 1 : index
    %15 = memref.load %arg0[%c1] : memref<128xf32, #tpu.memory_space<smem>>
    %16 = vector.broadcast %15 : f32 to vector<8x1xf32>
    %17 = arith.mulf %16, %2 : vector<8x1xf32>
    %18 = arith.addf %14, %17 : vector<8x1xf32>
    %c2 = arith.constant 2 : index
    %19 = memref.load %arg0[%c2] : memref<128xf32, #tpu.memory_space<smem>>
    %20 = vector.broadcast %19 : f32 to vector<8x1xf32>
    %21 = arith.mulf %20, %3 : vector<8x1xf32>
    %22 = arith.addf %18, %21 : vector<8x1xf32>
    %c3 = arith.constant 3 : index
    %23 = memref.load %arg0[%c3] : memref<128xf32, #tpu.memory_space<smem>>
    %24 = vector.broadcast %23 : f32 to vector<8x1xf32>
    %25 = arith.mulf %24, %4 : vector<8x1xf32>
    %26 = arith.addf %22, %25 : vector<8x1xf32>
    %c4 = arith.constant 4 : index
    %27 = memref.load %arg0[%c4] : memref<128xf32, #tpu.memory_space<smem>>
    %28 = vector.broadcast %27 : f32 to vector<8x1xf32>
    %29 = arith.mulf %28, %5 : vector<8x1xf32>
    %30 = arith.addf %26, %29 : vector<8x1xf32>
    %c5 = arith.constant 5 : index
    %31 = memref.load %arg0[%c5] : memref<128xf32, #tpu.memory_space<smem>>
    %32 = vector.broadcast %31 : f32 to vector<8x1xf32>
    %33 = arith.mulf %32, %6 : vector<8x1xf32>
    %34 = arith.addf %30, %33 : vector<8x1xf32>
    %c6 = arith.constant 6 : index
    %35 = memref.load %arg0[%c6] : memref<128xf32, #tpu.memory_space<smem>>
    %36 = vector.broadcast %35 : f32 to vector<8x1xf32>
    %37 = arith.mulf %36, %7 : vector<8x1xf32>
    %38 = arith.addf %34, %37 : vector<8x1xf32>
    %c7 = arith.constant 7 : index
    %39 = memref.load %arg0[%c7] : memref<128xf32, #tpu.memory_space<smem>>
    %40 = vector.broadcast %39 : f32 to vector<8x1xf32>
    %41 = arith.mulf %40, %8 : vector<8x1xf32>
    %42 = arith.addf %38, %41 : vector<8x1xf32>
    %cst = arith.constant 0.000000e+00 : f32
    %43 = vector.broadcast %cst : f32 to vector<8x1xf32>
    %44 = arith.maximumf %42, %43 : vector<8x1xf32>
    %c49 = arith.constant 49 : index
    %45 = memref.load %arg0[%c49] : memref<128xf32, #tpu.memory_space<smem>>
    %46 = vector.broadcast %45 : f32 to vector<8x1xf32>
    %c8 = arith.constant 8 : index
    %47 = memref.load %arg0[%c8] : memref<128xf32, #tpu.memory_space<smem>>
    %48 = vector.broadcast %47 : f32 to vector<8x1xf32>
    %49 = arith.mulf %48, %1 : vector<8x1xf32>
    %50 = arith.addf %46, %49 : vector<8x1xf32>
    %c9 = arith.constant 9 : index
    %51 = memref.load %arg0[%c9] : memref<128xf32, #tpu.memory_space<smem>>
    %52 = vector.broadcast %51 : f32 to vector<8x1xf32>
    %53 = arith.mulf %52, %2 : vector<8x1xf32>
    %54 = arith.addf %50, %53 : vector<8x1xf32>
    %c10 = arith.constant 10 : index
    %55 = memref.load %arg0[%c10] : memref<128xf32, #tpu.memory_space<smem>>
    %56 = vector.broadcast %55 : f32 to vector<8x1xf32>
    %57 = arith.mulf %56, %3 : vector<8x1xf32>
    %58 = arith.addf %54, %57 : vector<8x1xf32>
    %c11 = arith.constant 11 : index
    %59 = memref.load %arg0[%c11] : memref<128xf32, #tpu.memory_space<smem>>
    %60 = vector.broadcast %59 : f32 to vector<8x1xf32>
    %61 = arith.mulf %60, %4 : vector<8x1xf32>
    %62 = arith.addf %58, %61 : vector<8x1xf32>
    %c12 = arith.constant 12 : index
    %63 = memref.load %arg0[%c12] : memref<128xf32, #tpu.memory_space<smem>>
    %64 = vector.broadcast %63 : f32 to vector<8x1xf32>
    %65 = arith.mulf %64, %5 : vector<8x1xf32>
    %66 = arith.addf %62, %65 : vector<8x1xf32>
    %c13 = arith.constant 13 : index
    %67 = memref.load %arg0[%c13] : memref<128xf32, #tpu.memory_space<smem>>
    %68 = vector.broadcast %67 : f32 to vector<8x1xf32>
    %69 = arith.mulf %68, %6 : vector<8x1xf32>
    %70 = arith.addf %66, %69 : vector<8x1xf32>
    %c14 = arith.constant 14 : index
    %71 = memref.load %arg0[%c14] : memref<128xf32, #tpu.memory_space<smem>>
    %72 = vector.broadcast %71 : f32 to vector<8x1xf32>
    %73 = arith.mulf %72, %7 : vector<8x1xf32>
    %74 = arith.addf %70, %73 : vector<8x1xf32>
    %c15 = arith.constant 15 : index
    %75 = memref.load %arg0[%c15] : memref<128xf32, #tpu.memory_space<smem>>
    %76 = vector.broadcast %75 : f32 to vector<8x1xf32>
    %77 = arith.mulf %76, %8 : vector<8x1xf32>
    %78 = arith.addf %74, %77 : vector<8x1xf32>
    %cst_2 = arith.constant 0.000000e+00 : f32
    %79 = vector.broadcast %cst_2 : f32 to vector<8x1xf32>
    %80 = arith.maximumf %78, %79 : vector<8x1xf32>
    %c50 = arith.constant 50 : index
    %81 = memref.load %arg0[%c50] : memref<128xf32, #tpu.memory_space<smem>>
    %82 = vector.broadcast %81 : f32 to vector<8x1xf32>
    %c16 = arith.constant 16 : index
    %83 = memref.load %arg0[%c16] : memref<128xf32, #tpu.memory_space<smem>>
    %84 = vector.broadcast %83 : f32 to vector<8x1xf32>
    %85 = arith.mulf %84, %1 : vector<8x1xf32>
    %86 = arith.addf %82, %85 : vector<8x1xf32>
    %c17 = arith.constant 17 : index
    %87 = memref.load %arg0[%c17] : memref<128xf32, #tpu.memory_space<smem>>
    %88 = vector.broadcast %87 : f32 to vector<8x1xf32>
    %89 = arith.mulf %88, %2 : vector<8x1xf32>
    %90 = arith.addf %86, %89 : vector<8x1xf32>
    %c18 = arith.constant 18 : index
    %91 = memref.load %arg0[%c18] : memref<128xf32, #tpu.memory_space<smem>>
    %92 = vector.broadcast %91 : f32 to vector<8x1xf32>
    %93 = arith.mulf %92, %3 : vector<8x1xf32>
    %94 = arith.addf %90, %93 : vector<8x1xf32>
    %c19 = arith.constant 19 : index
    %95 = memref.load %arg0[%c19] : memref<128xf32, #tpu.memory_space<smem>>
    %96 = vector.broadcast %95 : f32 to vector<8x1xf32>
    %97 = arith.mulf %96, %4 : vector<8x1xf32>
    %98 = arith.addf %94, %97 : vector<8x1xf32>
    %c20 = arith.constant 20 : index
    %99 = memref.load %arg0[%c20] : memref<128xf32, #tpu.memory_space<smem>>
    %100 = vector.broadcast %99 : f32 to vector<8x1xf32>
    %101 = arith.mulf %100, %5 : vector<8x1xf32>
    %102 = arith.addf %98, %101 : vector<8x1xf32>
    %c21 = arith.constant 21 : index
    %103 = memref.load %arg0[%c21] : memref<128xf32, #tpu.memory_space<smem>>
    %104 = vector.broadcast %103 : f32 to vector<8x1xf32>
    %105 = arith.mulf %104, %6 : vector<8x1xf32>
    %106 = arith.addf %102, %105 : vector<8x1xf32>
    %c22 = arith.constant 22 : index
    %107 = memref.load %arg0[%c22] : memref<128xf32, #tpu.memory_space<smem>>
    %108 = vector.broadcast %107 : f32 to vector<8x1xf32>
    %109 = arith.mulf %108, %7 : vector<8x1xf32>
    %110 = arith.addf %106, %109 : vector<8x1xf32>
    %c23 = arith.constant 23 : index
    %111 = memref.load %arg0[%c23] : memref<128xf32, #tpu.memory_space<smem>>
    %112 = vector.broadcast %111 : f32 to vector<8x1xf32>
    %113 = arith.mulf %112, %8 : vector<8x1xf32>
    %114 = arith.addf %110, %113 : vector<8x1xf32>
    %cst_3 = arith.constant 0.000000e+00 : f32
    %115 = vector.broadcast %cst_3 : f32 to vector<8x1xf32>
    %116 = arith.maximumf %114, %115 : vector<8x1xf32>
    %c51 = arith.constant 51 : index
    %117 = memref.load %arg0[%c51] : memref<128xf32, #tpu.memory_space<smem>>
    %118 = vector.broadcast %117 : f32 to vector<8x1xf32>
    %c24 = arith.constant 24 : index
    %119 = memref.load %arg0[%c24] : memref<128xf32, #tpu.memory_space<smem>>
    %120 = vector.broadcast %119 : f32 to vector<8x1xf32>
    %121 = arith.mulf %120, %1 : vector<8x1xf32>
    %122 = arith.addf %118, %121 : vector<8x1xf32>
    %c25 = arith.constant 25 : index
    %123 = memref.load %arg0[%c25] : memref<128xf32, #tpu.memory_space<smem>>
    %124 = vector.broadcast %123 : f32 to vector<8x1xf32>
    %125 = arith.mulf %124, %2 : vector<8x1xf32>
    %126 = arith.addf %122, %125 : vector<8x1xf32>
    %c26 = arith.constant 26 : index
    %127 = memref.load %arg0[%c26] : memref<128xf32, #tpu.memory_space<smem>>
    %128 = vector.broadcast %127 : f32 to vector<8x1xf32>
    %129 = arith.mulf %128, %3 : vector<8x1xf32>
    %130 = arith.addf %126, %129 : vector<8x1xf32>
    %c27 = arith.constant 27 : index
    %131 = memref.load %arg0[%c27] : memref<128xf32, #tpu.memory_space<smem>>
    %132 = vector.broadcast %131 : f32 to vector<8x1xf32>
    %133 = arith.mulf %132, %4 : vector<8x1xf32>
    %134 = arith.addf %130, %133 : vector<8x1xf32>
    %c28 = arith.constant 28 : index
    %135 = memref.load %arg0[%c28] : memref<128xf32, #tpu.memory_space<smem>>
    %136 = vector.broadcast %135 : f32 to vector<8x1xf32>
    %137 = arith.mulf %136, %5 : vector<8x1xf32>
    %138 = arith.addf %134, %137 : vector<8x1xf32>
    %c29 = arith.constant 29 : index
    %139 = memref.load %arg0[%c29] : memref<128xf32, #tpu.memory_space<smem>>
    %140 = vector.broadcast %139 : f32 to vector<8x1xf32>
    %141 = arith.mulf %140, %6 : vector<8x1xf32>
    %142 = arith.addf %138, %141 : vector<8x1xf32>
    %c30 = arith.constant 30 : index
    %143 = memref.load %arg0[%c30] : memref<128xf32, #tpu.memory_space<smem>>
    %144 = vector.broadcast %143 : f32 to vector<8x1xf32>
    %145 = arith.mulf %144, %7 : vector<8x1xf32>
    %146 = arith.addf %142, %145 : vector<8x1xf32>
    %c31 = arith.constant 31 : index
    %147 = memref.load %arg0[%c31] : memref<128xf32, #tpu.memory_space<smem>>
    %148 = vector.broadcast %147 : f32 to vector<8x1xf32>
    %149 = arith.mulf %148, %8 : vector<8x1xf32>
    %150 = arith.addf %146, %149 : vector<8x1xf32>
    %cst_4 = arith.constant 0.000000e+00 : f32
    %151 = vector.broadcast %cst_4 : f32 to vector<8x1xf32>
    %152 = arith.maximumf %150, %151 : vector<8x1xf32>
    %c52 = arith.constant 52 : index
    %153 = memref.load %arg0[%c52] : memref<128xf32, #tpu.memory_space<smem>>
    %154 = vector.broadcast %153 : f32 to vector<8x1xf32>
    %c32 = arith.constant 32 : index
    %155 = memref.load %arg0[%c32] : memref<128xf32, #tpu.memory_space<smem>>
    %156 = vector.broadcast %155 : f32 to vector<8x1xf32>
    %157 = arith.mulf %156, %1 : vector<8x1xf32>
    %158 = arith.addf %154, %157 : vector<8x1xf32>
    %c33 = arith.constant 33 : index
    %159 = memref.load %arg0[%c33] : memref<128xf32, #tpu.memory_space<smem>>
    %160 = vector.broadcast %159 : f32 to vector<8x1xf32>
    %161 = arith.mulf %160, %2 : vector<8x1xf32>
    %162 = arith.addf %158, %161 : vector<8x1xf32>
    %c34 = arith.constant 34 : index
    %163 = memref.load %arg0[%c34] : memref<128xf32, #tpu.memory_space<smem>>
    %164 = vector.broadcast %163 : f32 to vector<8x1xf32>
    %165 = arith.mulf %164, %3 : vector<8x1xf32>
    %166 = arith.addf %162, %165 : vector<8x1xf32>
    %c35 = arith.constant 35 : index
    %167 = memref.load %arg0[%c35] : memref<128xf32, #tpu.memory_space<smem>>
    %168 = vector.broadcast %167 : f32 to vector<8x1xf32>
    %169 = arith.mulf %168, %4 : vector<8x1xf32>
    %170 = arith.addf %166, %169 : vector<8x1xf32>
    %c36 = arith.constant 36 : index
    %171 = memref.load %arg0[%c36] : memref<128xf32, #tpu.memory_space<smem>>
    %172 = vector.broadcast %171 : f32 to vector<8x1xf32>
    %173 = arith.mulf %172, %5 : vector<8x1xf32>
    %174 = arith.addf %170, %173 : vector<8x1xf32>
    %c37 = arith.constant 37 : index
    %175 = memref.load %arg0[%c37] : memref<128xf32, #tpu.memory_space<smem>>
    %176 = vector.broadcast %175 : f32 to vector<8x1xf32>
    %177 = arith.mulf %176, %6 : vector<8x1xf32>
    %178 = arith.addf %174, %177 : vector<8x1xf32>
    %c38 = arith.constant 38 : index
    %179 = memref.load %arg0[%c38] : memref<128xf32, #tpu.memory_space<smem>>
    %180 = vector.broadcast %179 : f32 to vector<8x1xf32>
    %181 = arith.mulf %180, %7 : vector<8x1xf32>
    %182 = arith.addf %178, %181 : vector<8x1xf32>
    %c39 = arith.constant 39 : index
    %183 = memref.load %arg0[%c39] : memref<128xf32, #tpu.memory_space<smem>>
    %184 = vector.broadcast %183 : f32 to vector<8x1xf32>
    %185 = arith.mulf %184, %8 : vector<8x1xf32>
    %186 = arith.addf %182, %185 : vector<8x1xf32>
    %cst_5 = arith.constant 0.000000e+00 : f32
    %187 = vector.broadcast %cst_5 : f32 to vector<8x1xf32>
    %188 = arith.maximumf %186, %187 : vector<8x1xf32>
    %c53 = arith.constant 53 : index
    %189 = memref.load %arg0[%c53] : memref<128xf32, #tpu.memory_space<smem>>
    %190 = vector.broadcast %189 : f32 to vector<8x1xf32>
    %c40 = arith.constant 40 : index
    %191 = memref.load %arg0[%c40] : memref<128xf32, #tpu.memory_space<smem>>
    %192 = vector.broadcast %191 : f32 to vector<8x1xf32>
    %193 = arith.mulf %192, %1 : vector<8x1xf32>
    %194 = arith.addf %190, %193 : vector<8x1xf32>
    %c41 = arith.constant 41 : index
    %195 = memref.load %arg0[%c41] : memref<128xf32, #tpu.memory_space<smem>>
    %196 = vector.broadcast %195 : f32 to vector<8x1xf32>
    %197 = arith.mulf %196, %2 : vector<8x1xf32>
    %198 = arith.addf %194, %197 : vector<8x1xf32>
    %c42 = arith.constant 42 : index
    %199 = memref.load %arg0[%c42] : memref<128xf32, #tpu.memory_space<smem>>
    %200 = vector.broadcast %199 : f32 to vector<8x1xf32>
    %201 = arith.mulf %200, %3 : vector<8x1xf32>
    %202 = arith.addf %198, %201 : vector<8x1xf32>
    %c43 = arith.constant 43 : index
    %203 = memref.load %arg0[%c43] : memref<128xf32, #tpu.memory_space<smem>>
    %204 = vector.broadcast %203 : f32 to vector<8x1xf32>
    %205 = arith.mulf %204, %4 : vector<8x1xf32>
    %206 = arith.addf %202, %205 : vector<8x1xf32>
    %c44 = arith.constant 44 : index
    %207 = memref.load %arg0[%c44] : memref<128xf32, #tpu.memory_space<smem>>
    %208 = vector.broadcast %207 : f32 to vector<8x1xf32>
    %209 = arith.mulf %208, %5 : vector<8x1xf32>
    %210 = arith.addf %206, %209 : vector<8x1xf32>
    %c45 = arith.constant 45 : index
    %211 = memref.load %arg0[%c45] : memref<128xf32, #tpu.memory_space<smem>>
    %212 = vector.broadcast %211 : f32 to vector<8x1xf32>
    %213 = arith.mulf %212, %6 : vector<8x1xf32>
    %214 = arith.addf %210, %213 : vector<8x1xf32>
    %c46 = arith.constant 46 : index
    %215 = memref.load %arg0[%c46] : memref<128xf32, #tpu.memory_space<smem>>
    %216 = vector.broadcast %215 : f32 to vector<8x1xf32>
    %217 = arith.mulf %216, %7 : vector<8x1xf32>
    %218 = arith.addf %214, %217 : vector<8x1xf32>
    %c47 = arith.constant 47 : index
    %219 = memref.load %arg0[%c47] : memref<128xf32, #tpu.memory_space<smem>>
    %220 = vector.broadcast %219 : f32 to vector<8x1xf32>
    %221 = arith.mulf %220, %8 : vector<8x1xf32>
    %222 = arith.addf %218, %221 : vector<8x1xf32>
    %cst_6 = arith.constant 0.000000e+00 : f32
    %223 = vector.broadcast %cst_6 : f32 to vector<8x1xf32>
    %224 = arith.maximumf %222, %223 : vector<8x1xf32>
    %c78 = arith.constant 78 : index
    %225 = memref.load %arg0[%c78] : memref<128xf32, #tpu.memory_space<smem>>
    %226 = vector.broadcast %225 : f32 to vector<8x1xf32>
    %c54 = arith.constant 54 : index
    %227 = memref.load %arg0[%c54] : memref<128xf32, #tpu.memory_space<smem>>
    %228 = vector.broadcast %227 : f32 to vector<8x1xf32>
    %229 = arith.mulf %228, %44 : vector<8x1xf32>
    %230 = arith.addf %226, %229 : vector<8x1xf32>
    %c55 = arith.constant 55 : index
    %231 = memref.load %arg0[%c55] : memref<128xf32, #tpu.memory_space<smem>>
    %232 = vector.broadcast %231 : f32 to vector<8x1xf32>
    %233 = arith.mulf %232, %80 : vector<8x1xf32>
    %234 = arith.addf %230, %233 : vector<8x1xf32>
    %c56 = arith.constant 56 : index
    %235 = memref.load %arg0[%c56] : memref<128xf32, #tpu.memory_space<smem>>
    %236 = vector.broadcast %235 : f32 to vector<8x1xf32>
    %237 = arith.mulf %236, %116 : vector<8x1xf32>
    %238 = arith.addf %234, %237 : vector<8x1xf32>
    %c57 = arith.constant 57 : index
    %239 = memref.load %arg0[%c57] : memref<128xf32, #tpu.memory_space<smem>>
    %240 = vector.broadcast %239 : f32 to vector<8x1xf32>
    %241 = arith.mulf %240, %152 : vector<8x1xf32>
    %242 = arith.addf %238, %241 : vector<8x1xf32>
    %c58 = arith.constant 58 : index
    %243 = memref.load %arg0[%c58] : memref<128xf32, #tpu.memory_space<smem>>
    %244 = vector.broadcast %243 : f32 to vector<8x1xf32>
    %245 = arith.mulf %244, %188 : vector<8x1xf32>
    %246 = arith.addf %242, %245 : vector<8x1xf32>
    %c59 = arith.constant 59 : index
    %247 = memref.load %arg0[%c59] : memref<128xf32, #tpu.memory_space<smem>>
    %248 = vector.broadcast %247 : f32 to vector<8x1xf32>
    %249 = arith.mulf %248, %224 : vector<8x1xf32>
    %250 = arith.addf %246, %249 : vector<8x1xf32>
    %cst_7 = arith.constant 0.000000e+00 : f32
    %251 = vector.broadcast %cst_7 : f32 to vector<8x1xf32>
    %252 = arith.maximumf %250, %251 : vector<8x1xf32>
    %c79 = arith.constant 79 : index
    %253 = memref.load %arg0[%c79] : memref<128xf32, #tpu.memory_space<smem>>
    %254 = vector.broadcast %253 : f32 to vector<8x1xf32>
    %c60 = arith.constant 60 : index
    %255 = memref.load %arg0[%c60] : memref<128xf32, #tpu.memory_space<smem>>
    %256 = vector.broadcast %255 : f32 to vector<8x1xf32>
    %257 = arith.mulf %256, %44 : vector<8x1xf32>
    %258 = arith.addf %254, %257 : vector<8x1xf32>
    %c61 = arith.constant 61 : index
    %259 = memref.load %arg0[%c61] : memref<128xf32, #tpu.memory_space<smem>>
    %260 = vector.broadcast %259 : f32 to vector<8x1xf32>
    %261 = arith.mulf %260, %80 : vector<8x1xf32>
    %262 = arith.addf %258, %261 : vector<8x1xf32>
    %c62 = arith.constant 62 : index
    %263 = memref.load %arg0[%c62] : memref<128xf32, #tpu.memory_space<smem>>
    %264 = vector.broadcast %263 : f32 to vector<8x1xf32>
    %265 = arith.mulf %264, %116 : vector<8x1xf32>
    %266 = arith.addf %262, %265 : vector<8x1xf32>
    %c63 = arith.constant 63 : index
    %267 = memref.load %arg0[%c63] : memref<128xf32, #tpu.memory_space<smem>>
    %268 = vector.broadcast %267 : f32 to vector<8x1xf32>
    %269 = arith.mulf %268, %152 : vector<8x1xf32>
    %270 = arith.addf %266, %269 : vector<8x1xf32>
    %c64 = arith.constant 64 : index
    %271 = memref.load %arg0[%c64] : memref<128xf32, #tpu.memory_space<smem>>
    %272 = vector.broadcast %271 : f32 to vector<8x1xf32>
    %273 = arith.mulf %272, %188 : vector<8x1xf32>
    %274 = arith.addf %270, %273 : vector<8x1xf32>
    %c65 = arith.constant 65 : index
    %275 = memref.load %arg0[%c65] : memref<128xf32, #tpu.memory_space<smem>>
    %276 = vector.broadcast %275 : f32 to vector<8x1xf32>
    %277 = arith.mulf %276, %224 : vector<8x1xf32>
    %278 = arith.addf %274, %277 : vector<8x1xf32>
    %cst_8 = arith.constant 0.000000e+00 : f32
    %279 = vector.broadcast %cst_8 : f32 to vector<8x1xf32>
    %280 = arith.maximumf %278, %279 : vector<8x1xf32>
    %c80 = arith.constant 80 : index
    %281 = memref.load %arg0[%c80] : memref<128xf32, #tpu.memory_space<smem>>
    %282 = vector.broadcast %281 : f32 to vector<8x1xf32>
    %c66 = arith.constant 66 : index
    %283 = memref.load %arg0[%c66] : memref<128xf32, #tpu.memory_space<smem>>
    %284 = vector.broadcast %283 : f32 to vector<8x1xf32>
    %285 = arith.mulf %284, %44 : vector<8x1xf32>
    %286 = arith.addf %282, %285 : vector<8x1xf32>
    %c67 = arith.constant 67 : index
    %287 = memref.load %arg0[%c67] : memref<128xf32, #tpu.memory_space<smem>>
    %288 = vector.broadcast %287 : f32 to vector<8x1xf32>
    %289 = arith.mulf %288, %80 : vector<8x1xf32>
    %290 = arith.addf %286, %289 : vector<8x1xf32>
    %c68 = arith.constant 68 : index
    %291 = memref.load %arg0[%c68] : memref<128xf32, #tpu.memory_space<smem>>
    %292 = vector.broadcast %291 : f32 to vector<8x1xf32>
    %293 = arith.mulf %292, %116 : vector<8x1xf32>
    %294 = arith.addf %290, %293 : vector<8x1xf32>
    %c69 = arith.constant 69 : index
    %295 = memref.load %arg0[%c69] : memref<128xf32, #tpu.memory_space<smem>>
    %296 = vector.broadcast %295 : f32 to vector<8x1xf32>
    %297 = arith.mulf %296, %152 : vector<8x1xf32>
    %298 = arith.addf %294, %297 : vector<8x1xf32>
    %c70 = arith.constant 70 : index
    %299 = memref.load %arg0[%c70] : memref<128xf32, #tpu.memory_space<smem>>
    %300 = vector.broadcast %299 : f32 to vector<8x1xf32>
    %301 = arith.mulf %300, %188 : vector<8x1xf32>
    %302 = arith.addf %298, %301 : vector<8x1xf32>
    %c71 = arith.constant 71 : index
    %303 = memref.load %arg0[%c71] : memref<128xf32, #tpu.memory_space<smem>>
    %304 = vector.broadcast %303 : f32 to vector<8x1xf32>
    %305 = arith.mulf %304, %224 : vector<8x1xf32>
    %306 = arith.addf %302, %305 : vector<8x1xf32>
    %cst_9 = arith.constant 0.000000e+00 : f32
    %307 = vector.broadcast %cst_9 : f32 to vector<8x1xf32>
    %308 = arith.maximumf %306, %307 : vector<8x1xf32>
    %c81 = arith.constant 81 : index
    %309 = memref.load %arg0[%c81] : memref<128xf32, #tpu.memory_space<smem>>
    %310 = vector.broadcast %309 : f32 to vector<8x1xf32>
    %c72 = arith.constant 72 : index
    %311 = memref.load %arg0[%c72] : memref<128xf32, #tpu.memory_space<smem>>
    %312 = vector.broadcast %311 : f32 to vector<8x1xf32>
    %313 = arith.mulf %312, %44 : vector<8x1xf32>
    %314 = arith.addf %310, %313 : vector<8x1xf32>
    %c73 = arith.constant 73 : index
    %315 = memref.load %arg0[%c73] : memref<128xf32, #tpu.memory_space<smem>>
    %316 = vector.broadcast %315 : f32 to vector<8x1xf32>
    %317 = arith.mulf %316, %80 : vector<8x1xf32>
    %318 = arith.addf %314, %317 : vector<8x1xf32>
    %c74 = arith.constant 74 : index
    %319 = memref.load %arg0[%c74] : memref<128xf32, #tpu.memory_space<smem>>
    %320 = vector.broadcast %319 : f32 to vector<8x1xf32>
    %321 = arith.mulf %320, %116 : vector<8x1xf32>
    %322 = arith.addf %318, %321 : vector<8x1xf32>
    %c75 = arith.constant 75 : index
    %323 = memref.load %arg0[%c75] : memref<128xf32, #tpu.memory_space<smem>>
    %324 = vector.broadcast %323 : f32 to vector<8x1xf32>
    %325 = arith.mulf %324, %152 : vector<8x1xf32>
    %326 = arith.addf %322, %325 : vector<8x1xf32>
    %c76 = arith.constant 76 : index
    %327 = memref.load %arg0[%c76] : memref<128xf32, #tpu.memory_space<smem>>
    %328 = vector.broadcast %327 : f32 to vector<8x1xf32>
    %329 = arith.mulf %328, %188 : vector<8x1xf32>
    %330 = arith.addf %326, %329 : vector<8x1xf32>
    %c77 = arith.constant 77 : index
    %331 = memref.load %arg0[%c77] : memref<128xf32, #tpu.memory_space<smem>>
    %332 = vector.broadcast %331 : f32 to vector<8x1xf32>
    %333 = arith.mulf %332, %224 : vector<8x1xf32>
    %334 = arith.addf %330, %333 : vector<8x1xf32>
    %cst_10 = arith.constant 0.000000e+00 : f32
    %335 = vector.broadcast %cst_10 : f32 to vector<8x1xf32>
    %336 = arith.maximumf %334, %335 : vector<8x1xf32>
    %c86 = arith.constant 86 : index
    %337 = memref.load %arg0[%c86] : memref<128xf32, #tpu.memory_space<smem>>
    %338 = vector.broadcast %337 : f32 to vector<8x1xf32>
    %c82 = arith.constant 82 : index
    %339 = memref.load %arg0[%c82] : memref<128xf32, #tpu.memory_space<smem>>
    %340 = vector.broadcast %339 : f32 to vector<8x1xf32>
    %341 = arith.mulf %340, %252 : vector<8x1xf32>
    %342 = arith.addf %338, %341 : vector<8x1xf32>
    %c83 = arith.constant 83 : index
    %343 = memref.load %arg0[%c83] : memref<128xf32, #tpu.memory_space<smem>>
    %344 = vector.broadcast %343 : f32 to vector<8x1xf32>
    %345 = arith.mulf %344, %280 : vector<8x1xf32>
    %346 = arith.addf %342, %345 : vector<8x1xf32>
    %c84 = arith.constant 84 : index
    %347 = memref.load %arg0[%c84] : memref<128xf32, #tpu.memory_space<smem>>
    %348 = vector.broadcast %347 : f32 to vector<8x1xf32>
    %349 = arith.mulf %348, %308 : vector<8x1xf32>
    %350 = arith.addf %346, %349 : vector<8x1xf32>
    %c85 = arith.constant 85 : index
    %351 = memref.load %arg0[%c85] : memref<128xf32, #tpu.memory_space<smem>>
    %352 = vector.broadcast %351 : f32 to vector<8x1xf32>
    %353 = arith.mulf %352, %336 : vector<8x1xf32>
    %354 = arith.addf %350, %353 : vector<8x1xf32>
    %cst_11 = arith.constant 0.000000e+00 : f32
    %355 = vector.broadcast %cst_11 : f32 to vector<8x1xf32>
    %356 = arith.subf %355, %354 : vector<8x1xf32>
    %357 = math.exp %356 : vector<8x1xf32>
    %cst_12 = arith.constant 1.000000e+00 : f32
    %358 = vector.broadcast %cst_12 : f32 to vector<8x1xf32>
    %359 = arith.addf %358, %357 : vector<8x1xf32>
    %360 = tpu.reciprocal %359 {approx = true} : vector<8x1xf32> -> vector<8x1xf32>
    %c0_13 = arith.constant 0 : index
    %c0_14 = arith.constant 0 : index
    %361 = vector.load %arg2[%c0_13, %c0_14] : memref<8x1xf32, #tpu.memory_space<vmem>>, vector<8x1xf32>
    tpu.vector_store %arg2[%c0_13, %c0_14], %360 {strides = array<i32>} : memref<8x1xf32, #tpu.memory_space<vmem>>, vector<8x1xf32>,
    return
  }
}

</mosaic_0001>

<llo_original>
// kernel: mlp_forward.1
$region0: #{mlp_forward.1}
  #allocation0 [shape = 'u32[]', space=smem, size = 0x4, offset = 0x4, fixed_abs, tag = 'smem constant byte address 0x4 - core index']
  #allocation1 [shape = 'u32[144,128]{1,0:T(1,128)}', space=vmem, size = 0x12000, scoped, tag = 'internal scratch']
  %s0 = inlined_call_operand.vmem [shape: f32[128], index: 0, kind: input, shape index: {}]
  %s1 = inlined_call_operand.hbm [shape: f32[8,8], index: 1, kind: input, shape index: {}]
  %s2 = inlined_call_operand.vmem [shape: f32[8,1], index: 2, kind: output, shape index: {}]
  %s3 = sld [smem:[#allocation0]]
  $region26: #{mlp_forward.1} parent=0
    _
  %s5 = ssub.s32 1, %s3
  %s6 = scalar_select 0, %s5, %s3
  $region1: #{mlp_forward.1} parent=0
    #allocation2 [shape = 'u8[512]{0}', space=smem, size = 0x200, scoped, tag = 'input window, operand 0, single buffered']
    #allocation3 [shape = 's32[1]{0}', space=sflag, size = 0x4, scoped, tag = 'scoped memory for mlp_forward.1']
    #allocation4 [shape = 's32[1]{0}', space=sflag, size = 0x4, scoped, tag = 'scoped memory for mlp_forward.1']
    #allocation5 [shape = 'u8[4096]{0}', space=vmem, size = 0x1000, scoped, tag = 'input window, operand 1, single buffered']
    %7 = vsyncpa [#allocation4], 0
    %8 = vsyncpa [#allocation3], 0
    // Predicated region
    $region2: #{mlp_forward.1} parent=1 // pred_check
      _
    $region3: #{mlp_forward.1} parent=1 // pred_check_branch
      %10 = sbr.rel (0) target = $region5
    $region4: #{mlp_forward.1} parent=1 // pred_region
      %s12 = ssub.s32 16, 16
      %13 = vsyncadd [#allocation4], %s12
      %s15 = sshll.u32 %s0, 4
      %s16 = int_to_ptr.vmem [resolvable:$true] %s15
      %18 = dma.vmem_to_smem %s16, 16, [#allocation2], [#allocation4]
    $region5: #{mlp_forward.1} parent=1 // pred_fallthru
      _
    // Predicated region
    $region6: #{mlp_forward.1} parent=1 // pred_check
      _
    $region7: #{mlp_forward.1} parent=1 // pred_check_branch
      %20 = sbr.rel (0) target = $region9
    $region8: #{mlp_forward.1} parent=1 // pred_region
      %s22 = ssub.s32 128, 128
      %23 = vsyncadd [#allocation3], %s22
      %s25 = sshll.u32 [#allocation5], 4
      %s26 = int_to_ptr.vmem [resolvable:$true] %s25
      %28 = dma.hbm_to_vmem [thread:$0]  %s1, 128, %s26, [#allocation3]
    $region9: #{mlp_forward.1} parent=1 // pred_fallthru
      _
    // Predicated region
    $region10: #{mlp_forward.1} parent=1 // pred_check
      _
    $region11: #{mlp_forward.1} parent=1 // pred_check_branch
      %30 = sbr.rel (0) target = $region13
    $region12: #{mlp_forward.1} parent=1 // pred_region
      %31 = dma.done [#allocation4], 16
    $region13: #{mlp_forward.1} parent=1 // pred_fallthru
      _
    // Predicated region
    $region14: #{mlp_forward.1} parent=1 // pred_check
      _
    $region15: #{mlp_forward.1} parent=1 // pred_check_branch
      %33 = sbr.rel (0) target = $region17
    $region16: #{mlp_forward.1} parent=1 // pred_region
      %34 = dma.done [#allocation3], 128
    $region17: #{mlp_forward.1} parent=1 // pred_fallthru
      _
    %35 = sfence
    %v36 = vld [vmem:[#allocation5] sm:$0xff]
    %s37 = sld [smem:[#allocation2 + $0x30]]
    %v38 = vstv %s37
    %s39 = sld [smem:[#allocation2]]
    %v40 = vstv %s39
    %v41 = vmul.f32 %v40, %v36
    %v42 = vadd.f32 %v38, %v41
    %s43 = sld [smem:[#allocation2 + $0x1]]
    %v44 = vstv %s43
    %v45 = vmul.f32 %v44, %v36
    %47 = vrot.lane.b32.xlu0 %v45, 127
    %v48 = vpop.permute.xlu0 %47
    %v50 = vadd.f32 %v42, %v48
    %s51 = sld [smem:[#allocation2 + $0x2]]
    %v52 = vstv %s51
    %v53 = vmul.f32 %v52, %v36
    %55 = vrot.lane.b32.xlu0 %v53, 126
    %v56 = vpop.permute.xlu0 %55
    %v58 = vadd.f32 %v50, %v56
    %s59 = sld [smem:[#allocation2 + $0x3]]
    %v60 = vstv %s59
    %v61 = vmul.f32 %v60, %v36
    %63 = vrot.lane.b32.xlu0 %v61, 125
    %v64 = vpop.permute.xlu0 %63
    %v66 = vadd.f32 %v58, %v64
    %s67 = sld [smem:[#allocation2 + $0x4]]
    %v68 = vstv %s67
    %v69 = vmul.f32 %v68, %v36
    %71 = vrot.lane.b32.xlu0 %v69, 124
    %v72 = vpop.permute.xlu0 %71
    %v74 = vadd.f32 %v66, %v72
    %s75 = sld [smem:[#allocation2 + $0x5]]
    %v76 = vstv %s75
    %v77 = vmul.f32 %v76, %v36
    %79 = vrot.lane.b32.xlu0 %v77, 123
    %v80 = vpop.permute.xlu0 %79
    %v82 = vadd.f32 %v74, %v80
    %s83 = sld [smem:[#allocation2 + $0x6]]
    %v84 = vstv %s83
    %v85 = vmul.f32 %v84, %v36
    %87 = vrot.lane.b32.xlu0 %v85, 122
    %v88 = vpop.permute.xlu0 %87
    %v90 = vadd.f32 %v82, %v88
    %s91 = sld [smem:[#allocation2 + $0x7]]
    %v92 = vstv %s91
    %v93 = vmul.f32 %v92, %v36
    %95 = vrot.lane.b32.xlu0 %v93, 121
    %v96 = vpop.permute.xlu0 %95
    %v98 = vadd.f32 %v90, %v96
    %v99 = vmax.f32 %v98, 0.0
    %s100 = sld [smem:[#allocation2 + $0x31]]
    %v101 = vstv %s100
    %s102 = sld [smem:[#allocation2 + $0x8]]
    %v103 = vstv %s102
    %v104 = vmul.f32 %v103, %v36
    %v105 = vadd.f32 %v101, %v104
    %s106 = sld [smem:[#allocation2 + $0x9]]
    %v107 = vstv %s106
    %v108 = vmul.f32 %v107, %v36
    %110 = vrot.lane.b32.xlu0 %v108, 127
    %v111 = vpop.permute.xlu0 %110
    %v113 = vadd.f32 %v105, %v111
    %s114 = sld [smem:[#allocation2 + $0xa]]
    %v115 = vstv %s114
    %v116 = vmul.f32 %v115, %v36
    %118 = vrot.lane.b32.xlu0 %v116, 126
    %v119 = vpop.permute.xlu0 %118
    %v121 = vadd.f32 %v113, %v119
    %s122 = sld [smem:[#allocation2 + $0xb]]
    %v123 = vstv %s122
    %v124 = vmul.f32 %v123, %v36
    %126 = vrot.lane.b32.xlu0 %v124, 125
    %v127 = vpop.permute.xlu0 %126
    %v129 = vadd.f32 %v121, %v127
    %s130 = sld [smem:[#allocation2 + $0xc]]
    %v131 = vstv %s130
    %v132 = vmul.f32 %v131, %v36
    %134 = vrot.lane.b32.xlu0 %v132, 124
    %v135 = vpop.permute.xlu0 %134
    %v137 = vadd.f32 %v129, %v135
    %s138 = sld [smem:[#allocation2 + $0xd]]
    %v139 = vstv %s138
    %v140 = vmul.f32 %v139, %v36
    %142 = vrot.lane.b32.xlu0 %v140, 123
    %v143 = vpop.permute.xlu0 %142
    %v145 = vadd.f32 %v137, %v143
    %s146 = sld [smem:[#allocation2 + $0xe]]
    %v147 = vstv %s146
    %v148 = vmul.f32 %v147, %v36
    %150 = vrot.lane.b32.xlu0 %v148, 122
    %v151 = vpop.permute.xlu0 %150
    %v153 = vadd.f32 %v145, %v151
    %s154 = sld [smem:[#allocation2 + $0xf]]
    %v155 = vstv %s154
    %v156 = vmul.f32 %v155, %v36
    %158 = vrot.lane.b32.xlu0 %v156, 121
    %v159 = vpop.permute.xlu0 %158
    %v161 = vadd.f32 %v153, %v159
    %v162 = vmax.f32 %v161, 0.0
    %s163 = sld [smem:[#allocation2 + $0x32]]
    %v164 = vstv %s163
    %s165 = sld [smem:[#allocation2 + $0x10]]
    %v166 = vstv %s165
    %v167 = vmul.f32 %v166, %v36
    %v168 = vadd.f32 %v164, %v167
    %s169 = sld [smem:[#allocation2 + $0x11]]
    %v170 = vstv %s169
    %v171 = vmul.f32 %v170, %v36
    %173 = vrot.lane.b32.xlu0 %v171, 127
    %v174 = vpop.permute.xlu0 %173
    %v176 = vadd.f32 %v168, %v174
    %s177 = sld [smem:[#allocation2 + $0x12]]
    %v178 = vstv %s177
    %v179 = vmul.f32 %v178, %v36
    %181 = vrot.lane.b32.xlu0 %v179, 126
    %v182 = vpop.permute.xlu0 %181
    %v184 = vadd.f32 %v176, %v182
    %s185 = sld [smem:[#allocation2 + $0x13]]
    %v186 = vstv %s185
    %v187 = vmul.f32 %v186, %v36
    %189 = vrot.lane.b32.xlu0 %v187, 125
    %v190 = vpop.permute.xlu0 %189
    %v192 = vadd.f32 %v184, %v190
    %s193 = sld [smem:[#allocation2 + $0x14]]
    %v194 = vstv %s193
    %v195 = vmul.f32 %v194, %v36
    %197 = vrot.lane.b32.xlu0 %v195, 124
    %v198 = vpop.permute.xlu0 %197
    %v200 = vadd.f32 %v192, %v198
    %s201 = sld [smem:[#allocation2 + $0x15]]
    %v202 = vstv %s201
    %v203 = vmul.f32 %v202, %v36
    %205 = vrot.lane.b32.xlu0 %v203, 123
    %v206 = vpop.permute.xlu0 %205
    %v208 = vadd.f32 %v200, %v206
    %s209 = sld [smem:[#allocation2 + $0x16]]
    %v210 = vstv %s209
    %v211 = vmul.f32 %v210, %v36
    %213 = vrot.lane.b32.xlu0 %v211, 122
    %v214 = vpop.permute.xlu0 %213
    %v216 = vadd.f32 %v208, %v214
    %s217 = sld [smem:[#allocation2 + $0x17]]
    %v218 = vstv %s217
    %v219 = vmul.f32 %v218, %v36
    %221 = vrot.lane.b32.xlu0 %v219, 121
    %v222 = vpop.permute.xlu0 %221
    %v224 = vadd.f32 %v216, %v222
    %v225 = vmax.f32 %v224, 0.0
    %s226 = sld [smem:[#allocation2 + $0x33]]
    %v227 = vstv %s226
    %s228 = sld [smem:[#allocation2 + $0x18]]
    %v229 = vstv %s228
    %v230 = vmul.f32 %v229, %v36
    %v231 = vadd.f32 %v227, %v230
    %s232 = sld [smem:[#allocation2 + $0x19]]
    %v233 = vstv %s232
    %v234 = vmul.f32 %v233, %v36
    %236 = vrot.lane.b32.xlu0 %v234, 127
    %v237 = vpop.permute.xlu0 %236
    %v239 = vadd.f32 %v231, %v237
    %s240 = sld [smem:[#allocation2 + $0x1a]]
    %v241 = vstv %s240
    %v242 = vmul.f32 %v241, %v36
    %244 = vrot.lane.b32.xlu0 %v242, 126
    %v245 = vpop.permute.xlu0 %244
    %v247 = vadd.f32 %v239, %v245
    %s248 = sld [smem:[#allocation2 + $0x1b]]
    %v249 = vstv %s248
    %v250 = vmul.f32 %v249, %v36
    %252 = vrot.lane.b32.xlu0 %v250, 125
    %v253 = vpop.permute.xlu0 %252
    %v255 = vadd.f32 %v247, %v253
    %s256 = sld [smem:[#allocation2 + $0x1c]]
    %v257 = vstv %s256
    %v258 = vmul.f32 %v257, %v36
    %260 = vrot.lane.b32.xlu0 %v258, 124
    %v261 = vpop.permute.xlu0 %260
    %v263 = vadd.f32 %v255, %v261
    %s264 = sld [smem:[#allocation2 + $0x1d]]
    %v265 = vstv %s264
    %v266 = vmul.f32 %v265, %v36
    %268 = vrot.lane.b32.xlu0 %v266, 123
    %v269 = vpop.permute.xlu0 %268
    %v271 = vadd.f32 %v263, %v269
    %s272 = sld [smem:[#allocation2 + $0x1e]]
    %v273 = vstv %s272
    %v274 = vmul.f32 %v273, %v36
    %276 = vrot.lane.b32.xlu0 %v274, 122
    %v277 = vpop.permute.xlu0 %276
    %v279 = vadd.f32 %v271, %v277
    %s280 = sld [smem:[#allocation2 + $0x1f]]
    %v281 = vstv %s280
    %v282 = vmul.f32 %v281, %v36
    %284 = vrot.lane.b32.xlu0 %v282, 121
    %v285 = vpop.permute.xlu0 %284
    %v287 = vadd.f32 %v279, %v285
    %v288 = vmax.f32 %v287, 0.0
    %s289 = sld [smem:[#allocation2 + $0x34]]
    %v290 = vstv %s289
    %s291 = sld [smem:[#allocation2 + $0x20]]
    %v292 = vstv %s291
    %v293 = vmul.f32 %v292, %v36
    %v294 = vadd.f32 %v290, %v293
    %s295 = sld [smem:[#allocation2 + $0x21]]
    %v296 = vstv %s295
    %v297 = vmul.f32 %v296, %v36
    %299 = vrot.lane.b32.xlu0 %v297, 127
    %v300 = vpop.permute.xlu0 %299
    %v302 = vadd.f32 %v294, %v300
    %s303 = sld [smem:[#allocation2 + $0x22]]
    %v304 = vstv %s303
    %v305 = vmul.f32 %v304, %v36
    %307 = vrot.lane.b32.xlu0 %v305, 126
    %v308 = vpop.permute.xlu0 %307
    %v310 = vadd.f32 %v302, %v308
    %s311 = sld [smem:[#allocation2 + $0x23]]
    %v312 = vstv %s311
    %v313 = vmul.f32 %v312, %v36
    %315 = vrot.lane.b32.xlu0 %v313, 125
    %v316 = vpop.permute.xlu0 %315
    %v318 = vadd.f32 %v310, %v316
    %s319 = sld [smem:[#allocation2 + $0x24]]
    %v320 = vstv %s319
    %v321 = vmul.f32 %v320, %v36
    %323 = vrot.lane.b32.xlu0 %v321, 124
    %v324 = vpop.permute.xlu0 %323
    %v326 = vadd.f32 %v318, %v324
    %s327 = sld [smem:[#allocation2 + $0x25]]
    %v328 = vstv %s327
    %v329 = vmul.f32 %v328, %v36
    %331 = vrot.lane.b32.xlu0 %v329, 123
    %v332 = vpop.permute.xlu0 %331
    %v334 = vadd.f32 %v326, %v332
    %s335 = sld [smem:[#allocation2 + $0x26]]
    %v336 = vstv %s335
    %v337 = vmul.f32 %v336, %v36
    %339 = vrot.lane.b32.xlu0 %v337, 122
    %v340 = vpop.permute.xlu0 %339
    %v342 = vadd.f32 %v334, %v340
    %s343 = sld [smem:[#allocation2 + $0x27]]
    %v344 = vstv %s343
    %v345 = vmul.f32 %v344, %v36
    %347 = vrot.lane.b32.xlu0 %v345, 121
    %v348 = vpop.permute.xlu0 %347
    %v350 = vadd.f32 %v342, %v348
    %v351 = vmax.f32 %v350, 0.0
    %s352 = sld [smem:[#allocation2 + $0x35]]
    %v353 = vstv %s352
    %s354 = sld [smem:[#allocation2 + $0x28]]
    %v355 = vstv %s354
    %v356 = vmul.f32 %v355, %v36
    %v357 = vadd.f32 %v353, %v356
    %s358 = sld [smem:[#allocation2 + $0x29]]
    %v359 = vstv %s358
    %v360 = vmul.f32 %v359, %v36
    %362 = vrot.lane.b32.xlu0 %v360, 127
    %v363 = vpop.permute.xlu0 %362
    %v365 = vadd.f32 %v357, %v363
    %s366 = sld [smem:[#allocation2 + $0x2a]]
    %v367 = vstv %s366
    %v368 = vmul.f32 %v367, %v36
    %370 = vrot.lane.b32.xlu0 %v368, 126
    %v371 = vpop.permute.xlu0 %370
    %v373 = vadd.f32 %v365, %v371
    %s374 = sld [smem:[#allocation2 + $0x2b]]
    %v375 = vstv %s374
    %v376 = vmul.f32 %v375, %v36
    %378 = vrot.lane.b32.xlu0 %v376, 125
    %v379 = vpop.permute.xlu0 %378
    %v381 = vadd.f32 %v373, %v379
    %s382 = sld [smem:[#allocation2 + $0x2c]]
    %v383 = vstv %s382
    %v384 = vmul.f32 %v383, %v36
    %386 = vrot.lane.b32.xlu0 %v384, 124
    %v387 = vpop.permute.xlu0 %386
    %v389 = vadd.f32 %v381, %v387
    %s390 = sld [smem:[#allocation2 + $0x2d]]
    %v391 = vstv %s390
    %v392 = vmul.f32 %v391, %v36
    %394 = vrot.lane.b32.xlu0 %v392, 123
    %v395 = vpop.permute.xlu0 %394
    %v397 = vadd.f32 %v389, %v395
    %s398 = sld [smem:[#allocation2 + $0x2e]]
    %v399 = vstv %s398
    %v400 = vmul.f32 %v399, %v36
    %402 = vrot.lane.b32.xlu0 %v400, 122
    %v403 = vpop.permute.xlu0 %402
    %v405 = vadd.f32 %v397, %v403
    %s406 = sld [smem:[#allocation2 + $0x2f]]
    %v407 = vstv %s406
    %v408 = vmul.f32 %v407, %v36
    %410 = vrot.lane.b32.xlu0 %v408, 121
    %v411 = vpop.permute.xlu0 %410
    %v413 = vadd.f32 %v405, %v411
    %v414 = vmax.f32 %v413, 0.0
    %s415 = sld [smem:[#allocation2 + $0x4e]]
    %v416 = vstv %s415
    %s417 = sld [smem:[#allocation2 + $0x36]]
    %v418 = vstv %s417
    %v419 = vmul.f32 %v418, %v99
    %v420 = vadd.f32 %v416, %v419
    %s421 = sld [smem:[#allocation2 + $0x37]]
    %v422 = vstv %s421
    %v423 = vmul.f32 %v422, %v162
    %v424 = vadd.f32 %v420, %v423
    %s425 = sld [smem:[#allocation2 + $0x38]]
    %v426 = vstv %s425
    %v427 = vmul.f32 %v426, %v225
    %v428 = vadd.f32 %v424, %v427
    %s429 = sld [smem:[#allocation2 + $0x39]]
    %v430 = vstv %s429
    %v431 = vmul.f32 %v430, %v288
    %v432 = vadd.f32 %v428, %v431
    %s433 = sld [smem:[#allocation2 + $0x3a]]
    %v434 = vstv %s433
    %v435 = vmul.f32 %v434, %v351
    %v436 = vadd.f32 %v432, %v435
    %s437 = sld [smem:[#allocation2 + $0x3b]]
    %v438 = vstv %s437
    %v439 = vmul.f32 %v438, %v414
    %v440 = vadd.f32 %v436, %v439
    %v441 = vmax.f32 %v440, 0.0
    %s442 = sld [smem:[#allocation2 + $0x4f]]
    %v443 = vstv %s442
    %s444 = sld [smem:[#allocation2 + $0x3c]]
    %v445 = vstv %s444
    %v446 = vmul.f32 %v445, %v99
    %v447 = vadd.f32 %v443, %v446
    %s448 = sld [smem:[#allocation2 + $0x3d]]
    %v449 = vstv %s448
    %v450 = vmul.f32 %v449, %v162
    %v451 = vadd.f32 %v447, %v450
    %s452 = sld [smem:[#allocation2 + $0x3e]]
    %v453 = vstv %s452
    %v454 = vmul.f32 %v453, %v225
    %v455 = vadd.f32 %v451, %v454
    %s456 = sld [smem:[#allocation2 + $0x3f]]
    %v457 = vstv %s456
    %v458 = vmul.f32 %v457, %v288
    %v459 = vadd.f32 %v455, %v458
    %s460 = sld [smem:[#allocation2 + $0x40]]
    %v461 = vstv %s460
    %v462 = vmul.f32 %v461, %v351
    %v463 = vadd.f32 %v459, %v462
    %s464 = sld [smem:[#allocation2 + $0x41]]
    %v465 = vstv %s464
    %v466 = vmul.f32 %v465, %v414
    %v467 = vadd.f32 %v463, %v466
    %v468 = vmax.f32 %v467, 0.0
    %s469 = sld [smem:[#allocation2 + $0x50]]
    %v470 = vstv %s469
    %s471 = sld [smem:[#allocation2 + $0x42]]
    %v472 = vstv %s471
    %v473 = vmul.f32 %v472, %v99
    %v474 = vadd.f32 %v470, %v473
    %s475 = sld [smem:[#allocation2 + $0x43]]
    %v476 = vstv %s475
    %v477 = vmul.f32 %v476, %v162
    %v478 = vadd.f32 %v474, %v477
    %s479 = sld [smem:[#allocation2 + $0x44]]
    %v480 = vstv %s479
    %v481 = vmul.f32 %v480, %v225
    %v482 = vadd.f32 %v478, %v481
    %s483 = sld [smem:[#allocation2 + $0x45]]
    %v484 = vstv %s483
    %v485 = vmul.f32 %v484, %v288
    %v486 = vadd.f32 %v482, %v485
    %s487 = sld [smem:[#allocation2 + $0x46]]
    %v488 = vstv %s487
    %v489 = vmul.f32 %v488, %v351
    %v490 = vadd.f32 %v486, %v489
    %s491 = sld [smem:[#allocation2 + $0x47]]
    %v492 = vstv %s491
    %v493 = vmul.f32 %v492, %v414
    %v494 = vadd.f32 %v490, %v493
    %v495 = vmax.f32 %v494, 0.0
    %s496 = sld [smem:[#allocation2 + $0x51]]
    %v497 = vstv %s496
    %s498 = sld [smem:[#allocation2 + $0x48]]
    %v499 = vstv %s498
    %v500 = vmul.f32 %v499, %v99
    %v501 = vadd.f32 %v497, %v500
    %s502 = sld [smem:[#allocation2 + $0x49]]
    %v503 = vstv %s502
    %v504 = vmul.f32 %v503, %v162
    %v505 = vadd.f32 %v501, %v504
    %s506 = sld [smem:[#allocation2 + $0x4a]]
    %v507 = vstv %s506
    %v508 = vmul.f32 %v507, %v225
    %v509 = vadd.f32 %v505, %v508
    %s510 = sld [smem:[#allocation2 + $0x4b]]
    %v511 = vstv %s510
    %v512 = vmul.f32 %v511, %v288
    %v513 = vadd.f32 %v509, %v512
    %s514 = sld [smem:[#allocation2 + $0x4c]]
    %v515 = vstv %s514
    %v516 = vmul.f32 %v515, %v351
    %v517 = vadd.f32 %v513, %v516
    %s518 = sld [smem:[#allocation2 + $0x4d]]
    %v519 = vstv %s518
    %v520 = vmul.f32 %v519, %v414
    %v521 = vadd.f32 %v517, %v520
    %v522 = vmax.f32 %v521, 0.0
    %s523 = sld [smem:[#allocation2 + $0x56]]
    %v524 = vstv %s523
    %s525 = sld [smem:[#allocation2 + $0x52]]
    %v526 = vstv %s525
    %v527 = vmul.f32 %v526, %v441
    %v528 = vadd.f32 %v524, %v527
    %s529 = sld [smem:[#allocation2 + $0x53]]
    %v530 = vstv %s529
    %v531 = vmul.f32 %v530, %v468
    %v532 = vadd.f32 %v528, %v531
    %s533 = sld [smem:[#allocation2 + $0x54]]
    %v534 = vstv %s533
    %v535 = vmul.f32 %v534, %v495
    %v536 = vadd.f32 %v532, %v535
    %s537 = sld [smem:[#allocation2 + $0x55]]
    %v538 = vstv %s537
    %v539 = vmul.f32 %v538, %v522
    %v540 = vadd.f32 %v536, %v539
    %v541 = vsub.f32 0.0, %v540
    %v542 = vmul.f32 %v541, 1.442695
    %v543 = vpow.pop %v542
    %v544 = vadd.f32 %v543, 1.0
    %v545 = vrcp.pop %v544
    %vm546 = vcmask 7168
    %547 = vst.msk [vmem:[%s2] sm:$0xff] %vm546, %v545
    // Predicated region
    $region18: #{mlp_forward.1} parent=1 // pred_check
      _
    $region19: #{mlp_forward.1} parent=1 // pred_check_branch
      %549 = sbr.rel (0) target = $region21
    $region20: #{mlp_forward.1} parent=1 // pred_region
      _
    $region21: #{mlp_forward.1} parent=1 // pred_fallthru
      _
    // Predicated region
    $region22: #{mlp_forward.1} parent=1 // pred_check
      _
    $region23: #{mlp_forward.1} parent=1 // pred_check_branch
      %551 = sbr.rel (0) target = $region25
    $region24: #{mlp_forward.1} parent=1 // pred_region
      _
    $region25: #{mlp_forward.1} parent=1 // pred_fallthru
      _
    %552 = vsyncpa [#allocation3], 1
    %553 = vsyncpa [#allocation4], 1

</llo_original>
